<compile_context>
chip_gen: v5e
topology: v5e:2x2
jax: 0.10.0
libtpu: 0.0.40
codegen_flags: <defaults>
</compile_context>

<pallas_src>
import functools
import math

import jax
import jax.numpy as jnp
import numpy as np
from jax.experimental import pallas as pl
from jax.experimental.pallas import tpu as pltpu

LOG2PI = math.log(2.0 * math.pi)
# bf16 operands for the MXU; accumulation (preferred_element_type) and all
# log-prob / softplus math stay in f32.
MXU_DTYPE = jnp.bfloat16


def _vae_tile_kernel(x_ref, eps_ref,
                     w1_ref, b1_ref,
                     w2m_ref, b2m_ref, w2s_ref, b2s_ref,
                     w3_ref, b3_ref, w4_ref, b4_ref,
                     o_ref, *, total_b):
    i = pl.program_id(0)
    tb = x_ref.shape[0]

    x = x_ref[...]                                   # (TB, D) f32
    eps = eps_ref[...].astype(jnp.float32)           # (TB, M)

    # ---------------- encoder: q(z|x) --------------------------------------
    x_mx = x.astype(MXU_DTYPE)
    h1 = jnp.dot(x_mx, w1_ref[...], preferred_element_type=jnp.float32) + b1_ref[...]
    h1 = jnp.maximum(h1, 0.0)                        # (TB, H1)
    h1_mx = h1.astype(MXU_DTYPE)

    # Split mean / log_std heads: two lane-aligned matmuls instead of slicing a
    # 2M-wide result at a non-128 lane offset.
    mean = jnp.dot(h1_mx, w2m_ref[...], preferred_element_type=jnp.float32) + b2m_ref[...]
    log_std = jnp.dot(h1_mx, w2s_ref[...], preferred_element_type=jnp.float32) + b2s_ref[...]
    std = jnp.exp(log_std)

    # reparameterized sample z = q.rsample()
    z = mean + std * eps                             # (TB, M)

    # log q(z|x): Normal(mean, std), summed over latent dims.
    # (z - mean) / std == eps exactly, so use eps directly (no divide).
    log_q = jnp.sum(-log_std - 0.5 * (eps * eps) - 0.5 * LOG2PI,
                    axis=-1, keepdims=True)          # (TB, 1)

    # log p(z): standard-normal prior
    log_prior = jnp.sum(-0.5 * (z * z) - 0.5 * LOG2PI,
                        axis=-1, keepdims=True)      # (TB, 1)

    # ---------------- decoder: p(x|z) ---------------------------------------
    h2 = jnp.dot(z.astype(MXU_DTYPE), w3_ref[...], preferred_element_type=jnp.float32) + b3_ref[...]
    h2 = jnp.maximum(h2, 0.0)                        # (TB, H1)
    logits = jnp.dot(h2.astype(MXU_DTYPE), w4_ref[...], preferred_element_type=jnp.float32) + b4_ref[...]

    # Bernoulli(logits).log_prob(x) = x*logits - softplus(logits)  (stable form,
    # kept general so non-{0,1} inputs still match the reference module).
    softplus = jnp.maximum(logits, 0.0) + jnp.log1p(jnp.exp(-jnp.abs(logits)))
    recon = jnp.sum(x * logits - softplus, axis=-1, keepdims=True)   # (TB, 1)

    # ---------------- ELBO (per-tile partial sum) ---------------------------
    elbo = recon + log_prior - log_q                 # (TB, 1)

    # mask padded rows of a ragged final tile so the batch mean stays exact
    row = jax.lax.broadcasted_iota(jnp.int32, (tb, 1), 0) + i * tb
    elbo = jnp.where(row < total_b, elbo, 0.0)

    tile_sum = jnp.sum(elbo)
    # lane-dense, unmasked store of the partial sum (reduced in the wrapper)
    o_ref[...] = tile_sum * jnp.ones(o_ref.shape, jnp.float32)


def vae_neg_elbo(x_nchw, eps, params, *, tile_b=128):
    """forward(x) = -ELBO(x).  x_nchw: (B,C,H,W) f32; eps: (B,M) N(0,1) draws."""
    B = x_nchw.shape[0]
    x_flat = x_nchw.reshape(B, -1)        # row-major flatten, matches torch.flatten
    D = x_flat.shape[1]
    M = eps.shape[1]

    w1, b1, w2, b2, w3, b3, w4, b4 = params
    H1 = w1.shape[1]

    # split the encoder head so mean / log_std come out of separate matmuls
    w2m, w2s = w2[:, :M], w2[:, M:2 * M]
    b2m, b2s = b2[:, :M], b2[:, M:2 * M]

    # bf16 weights for the MXU (biases stay f32 and are added post-accumulation)
    w1c, w2mc, w2sc, w3c, w4c = (w.astype(MXU_DTYPE) for w in (w1, w2m, w2s, w3, w4))

    # batch tile: multiple of 8 sublanes, capped by B
    tb = min(tile_b, B)
    tb = max(8, (tb // 8) * 8) if B >= 8 else B
    num_tiles = pl.cdiv(B, tb)

    in_specs = [
        pl.BlockSpec((tb, D), lambda i: (i, 0)),       # x tile
        pl.BlockSpec((tb, M), lambda i: (i, 0)),       # eps tile
        pl.BlockSpec((D, H1), lambda i: (0, 0)),       # w1 (resident)
        pl.BlockSpec((1, H1), lambda i: (0, 0)),       # b1
        pl.BlockSpec((H1, M), lambda i: (0, 0)),       # w2_mean
        pl.BlockSpec((1, M), lambda i: (0, 0)),        # b2_mean
        pl.BlockSpec((H1, M), lambda i: (0, 0)),       # w2_logstd
        pl.BlockSpec((1, M), lambda i: (0, 0)),        # b2_logstd
        pl.BlockSpec((M, H1), lambda i: (0, 0)),       # w3
        pl.BlockSpec((1, H1), lambda i: (0, 0)),       # b3
        pl.BlockSpec((H1, D), lambda i: (0, 0)),       # w4
        pl.BlockSpec((1, D), lambda i: (0, 0)),        # b4
    ]
    out_specs = pl.BlockSpec((1, 8, 128), lambda i: (i, 0, 0))
    out_shape = jax.ShapeDtypeStruct((num_tiles, 8, 128), jnp.float32)

    # advisory cost hint for XLA scheduling around the kernel
    flops = 2 * B * (2 * D * H1 + 3 * H1 * M)
    transcendentals = B * (2 * D + M)
    bytes_accessed = (4 * B * (D + M)                       # x, eps (f32)
                      + 2 * (2 * D * H1 + 3 * H1 * M)       # bf16 weights
                      + 4 * (2 * H1 + 2 * M + D)            # f32 biases
                      + 4 * num_tiles * 8 * 128)            # partial-sum output
    cost = pl.CostEstimate(flops=flops, transcendentals=transcendentals,
                           bytes_accessed=bytes_accessed)

    partial = pl.pallas_call(
        functools.partial(_vae_tile_kernel, total_b=B),
        out_shape=out_shape,
        grid=(num_tiles,),
        in_specs=in_specs,
        out_specs=out_specs,
        compiler_params=pltpu.CompilerParams(
            dimension_semantics=("parallel",),      # megacore-shardable on v7x
            vmem_limit_bytes=32 * 1024 * 1024,      # explicit, safe on v5e/v6e/v7x
        ),
        cost_estimate=cost,
    )(x_flat, eps, w1c, b1, w2mc, b2m, w2sc, b2s, w3c, b3, w4c, b4)

    elbo_mean = jnp.sum(partial[:, 0, 0]) / B
    return -elbo_mean


def _vae_neg_elbo_ref(x_nchw, eps, params):
    """Pure-JAX f32 reference for the same forward pass."""
    x = x_nchw.reshape(x_nchw.shape[0], -1)
    w1, b1, w2, b2, w3, b3, w4, b4 = params
    M = eps.shape[-1]
    h1 = jax.nn.relu(x @ w1 + b1)
    enc = h1 @ w2 + b2
    mean, log_std = enc[:, :M], enc[:, M:2 * M]
    std = jnp.exp(log_std)
    z = mean + std * eps
    log_q = jnp.sum(-log_std - 0.5 * ((z - mean) / std) ** 2 - 0.5 * LOG2PI, axis=-1)
    log_p = jnp.sum(-0.5 * z * z - 0.5 * LOG2PI, axis=-1)
    h2 = jax.nn.relu(z @ w3 + b3)
    logits = h2 @ w4 + b4
    softplus = jnp.maximum(logits, 0.0) + jnp.log1p(jnp.exp(-jnp.abs(logits)))
    recon = jnp.sum(x * logits - softplus, axis=-1)
    return -jnp.mean(recon + log_p - log_q)


def init_params(key, D, H1, M):
    """Deterministic, PyTorch-Linear-style uniform init."""
    ks = jax.random.split(key, 8)

    def lin(kw, kb, fan_in, fan_out):
        bound = 1.0 / math.sqrt(fan_in)
        w = jax.random.uniform(kw, (fan_in, fan_out), jnp.float32, -bound, bound)
        b = jax.random.uniform(kb, (1, fan_out), jnp.float32, -bound, bound)
        return w, b

    w1, b1 = lin(ks[0], ks[1], D, H1)          # encoder layer 1
    w2, b2 = lin(ks[2], ks[3], H1, 2 * M)      # encoder layer 2 -> (mean, log_std)
    w3, b3 = lin(ks[4], ks[5], M, H1)          # decoder layer 1
    w4, b4 = lin(ks[6], ks[7], H1, D)          # decoder layer 2 -> Bernoulli logits
    return (w1, b1, w2, b2, w3, b3, w4, b4)


if __name__ == "__main__":
    # Small shapes: batch=16, channels=1, spatial=16x16 -> D=256, hidden=32, latent=8
    B, C, H, W = 16, 1, 16, 16
    D, H1, M = C * H * W, 32, 8

    key = jax.random.PRNGKey(0)
    k_x, k_eps, k_p = jax.random.split(key, 3)

    # binary image data (Bernoulli likelihood)
    x = (jax.random.uniform(k_x, (B, C, H, W), jnp.float32) > 0.5).astype(jnp.float32)
    # deterministic reparameterization noise (stands in for q.rsample()'s randomness)
    # TODO(synk): could be generated in-kernel via pltpu.prng_seed if bitwise
    # reproducibility with an external sampler is not needed.
    eps = jax.random.normal(k_eps, (B, M), jnp.float32)

    params = init_params(k_p, D, H1, M)

    neg_elbo = vae_neg_elbo(x, eps, params, tile_b=8)   # grid=(2,): pipelined batch tiles
    jax.block_until_ready(neg_elbo)

    # sanity: finite scalar matching the f32 reference (bf16 MXU => loose tol)
    assert neg_elbo.shape == () and bool(jnp.isfinite(neg_elbo))
    ref = _vae_neg_elbo_ref(x, eps, params)
    np.testing.assert_allclose(np.asarray(neg_elbo), np.asarray(ref), rtol=2e-2, atol=0.5)
    print("KERNEL_OK")
</pallas_src>

<mosaic_0001>
module attributes {stable_mosaic.version = 11 : i64} {
  func.func @_vae_tile_kernel(%arg0: i32, %arg1: memref<8x256xf32, #tpu.memory_space<vmem>>, %arg2: memref<8x8xf32, #tpu.memory_space<vmem>>, %arg3: memref<256x32xbf16, #tpu.memory_space<vmem>>, %arg4: memref<1x32xf32, #tpu.memory_space<vmem>>, %arg5: memref<32x8xbf16, #tpu.memory_space<vmem>>, %arg6: memref<1x8xf32, #tpu.memory_space<vmem>>, %arg7: memref<32x8xbf16, #tpu.memory_space<vmem>>, %arg8: memref<1x8xf32, #tpu.memory_space<vmem>>, %arg9: memref<8x32xbf16, #tpu.memory_space<vmem>>, %arg10: memref<1x32xf32, #tpu.memory_space<vmem>>, %arg11: memref<32x256xbf16, #tpu.memory_space<vmem>>, %arg12: memref<1x256xf32, #tpu.memory_space<vmem>>, %arg13: memref<1x8x128xf32, #tpu.memory_space<vmem>>) attributes {dimension_semantics = [#tpu.dimension_semantics<parallel>], iteration_bounds = array<i64: 2>, scalar_prefetch = 0 : i64, scratch_operands = 0 : i64, tpu.core_type = #tpu.core_type<tc>, window_params = [{transform_indices = @transform_0, window_bounds = array<i64: 8, 256>}, {transform_indices = @transform_1, window_bounds = array<i64: 8, 8>}, {pipeline_mode = #tpu.pipeline_mode<synchronous>, transform_indices = @transform_2, window_bounds = array<i64: 256, 32>}, {pipeline_mode = #tpu.pipeline_mode<synchronous>, transform_indices = @transform_3, window_bounds = array<i64: 1, 32>}, {pipeline_mode = #tpu.pipeline_mode<synchronous>, transform_indices = @transform_4, window_bounds = array<i64: 32, 8>}, {pipeline_mode = #tpu.pipeline_mode<synchronous>, transform_indices = @transform_5, window_bounds = array<i64: 1, 8>}, {pipeline_mode = #tpu.pipeline_mode<synchronous>, transform_indices = @transform_6, window_bounds = array<i64: 32, 8>}, {pipeline_mode = #tpu.pipeline_mode<synchronous>, transform_indices = @transform_7, window_bounds = array<i64: 1, 8>}, {pipeline_mode = #tpu.pipeline_mode<synchronous>, transform_indices = @transform_8, window_bounds = array<i64: 8, 32>}, {pipeline_mode = #tpu.pipeline_mode<synchronous>, transform_indices = @transform_9, window_bounds = array<i64: 1, 32>}, {pipeline_mode = #tpu.pipeline_mode<synchronous>, transform_indices = @transform_10, window_bounds = array<i64: 32, 256>}, {pipeline_mode = #tpu.pipeline_mode<synchronous>, transform_indices = @transform_11, window_bounds = array<i64: 1, 256>}, {transform_indices = @transform_12, window_bounds = array<i64: 1, 8, 128>}]} {
    %c0 = arith.constant 0 : index
    %c0_0 = arith.constant 0 : index
    %0 = vector.load %arg1[%c0, %c0_0] : memref<8x256xf32, #tpu.memory_space<vmem>>, vector<8x256xf32>
    %c0_1 = arith.constant 0 : index
    %c0_2 = arith.constant 0 : index
    %1 = vector.load %arg2[%c0_1, %c0_2] : memref<8x8xf32, #tpu.memory_space<vmem>>, vector<8x8xf32>
    %2 = arith.truncf %0 : vector<8x256xf32> to vector<8x256xbf16>
    %c0_3 = arith.constant 0 : index
    %c0_4 = arith.constant 0 : index
    %3 = vector.load %arg3[%c0_3, %c0_4] : memref<256x32xbf16, #tpu.memory_space<vmem>>, vector<256x32xbf16>
    %cst = arith.constant dense<0.000000e+00> : vector<8x32xf32>
    %4 = tpu.matmul %2, %3, %cst {dimension_numbers = #tpu.dot_dimension_numbers<[1], [0], [0], [1], [0, 0, 1, 1], [], []>} : vector<8x256xbf16>, vector<256x32xbf16>, vector<8x32xf32> -> vector<8x32xf32>
    %c0_5 = arith.constant 0 : index
    %c0_6 = arith.constant 0 : index
    %5 = vector.load %arg4[%c0_5, %c0_6] : memref<1x32xf32, #tpu.memory_space<vmem>>, vector<1x32xf32>
    %6 = vector.broadcast %5 : vector<1x32xf32> to vector<8x32xf32>
    %7 = arith.addf %4, %6 : vector<8x32xf32>
    %cst_7 = arith.constant 0.000000e+00 : f32
    %8 = vector.broadcast %cst_7 : f32 to vector<8x32xf32>
    %9 = arith.maximumf %7, %8 : vector<8x32xf32>
    %10 = arith.truncf %9 : vector<8x32xf32> to vector<8x32xbf16>
    %c0_8 = arith.constant 0 : index
    %c0_9 = arith.constant 0 : index
    %11 = vector.load %arg5[%c0_8, %c0_9] : memref<32x8xbf16, #tpu.memory_space<vmem>>, vector<32x8xbf16>
    %cst_10 = arith.constant dense<0.000000e+00> : vector<8x8xf32>
    %12 = tpu.matmul %10, %11, %cst_10 {dimension_numbers = #tpu.dot_dimension_numbers<[1], [0], [0], [1], [0, 0, 1, 1], [], []>} : vector<8x32xbf16>, vector<32x8xbf16>, vector<8x8xf32> -> vector<8x8xf32>
    %c0_11 = arith.constant 0 : index
    %c0_12 = arith.constant 0 : index
    %13 = vector.load %arg6[%c0_11, %c0_12] : memref<1x8xf32, #tpu.memory_space<vmem>>, vector<1x8xf32>
    %14 = vector.broadcast %13 : vector<1x8xf32> to vector<8x8xf32>
    %15 = arith.addf %12, %14 : vector<8x8xf32>
    %c0_13 = arith.constant 0 : index
    %c0_14 = arith.constant 0 : index
    %16 = vector.load %arg7[%c0_13, %c0_14] : memref<32x8xbf16, #tpu.memory_space<vmem>>, vector<32x8xbf16>
    %cst_15 = arith.constant dense<0.000000e+00> : vector<8x8xf32>
    %17 = tpu.matmul %10, %16, %cst_15 {dimension_numbers = #tpu.dot_dimension_numbers<[1], [0], [0], [1], [0, 0, 1, 1], [], []>} : vector<8x32xbf16>, vector<32x8xbf16>, vector<8x8xf32> -> vector<8x8xf32>
    %c0_16 = arith.constant 0 : index
    %c0_17 = arith.constant 0 : index
    %18 = vector.load %arg8[%c0_16, %c0_17] : memref<1x8xf32, #tpu.memory_space<vmem>>, vector<1x8xf32>
    %19 = vector.broadcast %18 : vector<1x8xf32> to vector<8x8xf32>
    %20 = arith.addf %17, %19 : vector<8x8xf32>
    %21 = math.exp %20 : vector<8x8xf32>
    %22 = arith.mulf %21, %1 : vector<8x8xf32>
    %23 = arith.addf %15, %22 : vector<8x8xf32>
    %cst_18 = arith.constant 0.000000e+00 : f32
    %24 = vector.broadcast %cst_18 : f32 to vector<8x8xf32>
    %25 = arith.subf %24, %20 : vector<8x8xf32>
    %26 = arith.mulf %1, %1 : vector<8x8xf32>
    %cst_19 = arith.constant 5.000000e-01 : f32
    %27 = vector.broadcast %cst_19 : f32 to vector<8x8xf32>
    %28 = arith.mulf %27, %26 : vector<8x8xf32>
    %29 = arith.subf %25, %28 : vector<8x8xf32>
    %cst_20 = arith.constant 0.918938517 : f32
    %30 = vector.broadcast %cst_20 : f32 to vector<8x8xf32>
    %31 = arith.subf %29, %30 : vector<8x8xf32>
    %cst_21 = arith.constant dense<0.000000e+00> : vector<8xf32>
    %32 = vector.multi_reduction <add>, %31, %cst_21 [1] : vector<8x8xf32> to vector<8xf32>
    %33 = vector.shape_cast %32 : vector<8xf32> to vector<8x1xf32>
    %34 = arith.mulf %23, %23 : vector<8x8xf32>
    %cst_22 = arith.constant -5.000000e-01 : f32
    %35 = vector.broadcast %cst_22 : f32 to vector<8x8xf32>
    %36 = arith.mulf %35, %34 : vector<8x8xf32>
    %cst_23 = arith.constant 0.918938517 : f32
    %37 = vector.broadcast %cst_23 : f32 to vector<8x8xf32>
    %38 = arith.subf %36, %37 : vector<8x8xf32>
    %cst_24 = arith.constant dense<0.000000e+00> : vector<8xf32>
    %39 = vector.multi_reduction <add>, %38, %cst_24 [1] : vector<8x8xf32> to vector<8xf32>
    %40 = vector.shape_cast %39 : vector<8xf32> to vector<8x1xf32>
    %41 = arith.truncf %23 : vector<8x8xf32> to vector<8x8xbf16>
    %c0_25 = arith.constant 0 : index
    %c0_26 = arith.constant 0 : index
    %42 = vector.load %arg9[%c0_25, %c0_26] : memref<8x32xbf16, #tpu.memory_space<vmem>>, vector<8x32xbf16>
    %cst_27 = arith.constant dense<0.000000e+00> : vector<8x32xf32>
    %43 = tpu.matmul %41, %42, %cst_27 {dimension_numbers = #tpu.dot_dimension_numbers<[1], [0], [0], [1], [0, 0, 1, 1], [], []>} : vector<8x8xbf16>, vector<8x32xbf16>, vector<8x32xf32> -> vector<8x32xf32>
    %c0_28 = arith.constant 0 : index
    %c0_29 = arith.constant 0 : index
    %44 = vector.load %arg10[%c0_28, %c0_29] : memref<1x32xf32, #tpu.memory_space<vmem>>, vector<1x32xf32>
    %45 = vector.broadcast %44 : vector<1x32xf32> to vector<8x32xf32>
    %46 = arith.addf %43, %45 : vector<8x32xf32>
    %cst_30 = arith.constant 0.000000e+00 : f32
    %47 = vector.broadcast %cst_30 : f32 to vector<8x32xf32>
    %48 = arith.maximumf %46, %47 : vector<8x32xf32>
    %49 = arith.truncf %48 : vector<8x32xf32> to vector<8x32xbf16>
    %c0_31 = arith.constant 0 : index
    %c0_32 = arith.constant 0 : index
    %50 = vector.load %arg11[%c0_31, %c0_32] : memref<32x256xbf16, #tpu.memory_space<vmem>>, vector<32x256xbf16>
    %cst_33 = arith.constant dense<0.000000e+00> : vector<8x256xf32>
    %51 = tpu.matmul %49, %50, %cst_33 {dimension_numbers = #tpu.dot_dimension_numbers<[1], [0], [0], [1], [0, 0, 1, 1], [], []>} : vector<8x32xbf16>, vector<32x256xbf16>, vector<8x256xf32> -> vector<8x256xf32>
    %c0_34 = arith.constant 0 : index
    %c0_35 = arith.constant 0 : index
    %52 = vector.load %arg12[%c0_34, %c0_35] : memref<1x256xf32, #tpu.memory_space<vmem>>, vector<1x256xf32>
    %53 = vector.broadcast %52 : vector<1x256xf32> to vector<8x256xf32>
    %54 = arith.addf %51, %53 : vector<8x256xf32>
    %cst_36 = arith.constant 0.000000e+00 : f32
    %55 = vector.broadcast %cst_36 : f32 to vector<8x256xf32>
    %56 = arith.maximumf %54, %55 : vector<8x256xf32>
    %57 = math.absf %54 : vector<8x256xf32>
    %cst_37 = arith.constant 0.000000e+00 : f32
    %58 = vector.broadcast %cst_37 : f32 to vector<8x256xf32>
    %59 = arith.subf %58, %57 : vector<8x256xf32>
    %60 = math.exp %59 : vector<8x256xf32>
    %61 = math.log1p %60 : vector<8x256xf32>
    %62 = arith.addf %56, %61 : vector<8x256xf32>
    %63 = arith.mulf %0, %54 : vector<8x256xf32>
    %64 = arith.subf %63, %62 : vector<8x256xf32>
    %cst_38 = arith.constant dense<0.000000e+00> : vector<8xf32>
    %65 = vector.multi_reduction <add>, %64, %cst_38 [1] : vector<8x256xf32> to vector<8xf32>
    %66 = vector.shape_cast %65 : vector<8xf32> to vector<8x1xf32>
    %67 = arith.addf %66, %40 : vector<8x1xf32>
    %68 = arith.subf %67, %33 : vector<8x1xf32>
    %69 = tpu.iota {dimensions = array<i32: 0>} : vector<8x1xi32>
    %c8_i32 = arith.constant 8 : i32
    %70 = arith.muli %arg0, %c8_i32 : i32
    %71 = vector.broadcast %70 : i32 to vector<8x1xi32>
    %72 = arith.addi %69, %71 : vector<8x1xi32>
    %c16_i32 = arith.constant 16 : i32
    %73 = vector.broadcast %c16_i32 : i32 to vector<8x1xi32>
    %74 = arith.cmpi slt, %72, %73 : vector<8x1xi32>
    %cst_39 = arith.constant 0.000000e+00 : f32
    %75 = vector.broadcast %cst_39 : f32 to vector<8x1xf32>
    %76 = arith.select %74, %68, %75 : vector<8x1xi1>, vector<8x1xf32>
    %77 = vector.shape_cast %76 : vector<8x1xf32> to vector<1x8x1xf32>
    %cst_40 = arith.constant dense<0.000000e+00> : vector<1xf32>
    %78 = vector.multi_reduction <add>, %77, %cst_40 [1, 2] : vector<1x8x1xf32> to vector<1xf32>
    %79 = vector.shape_cast %78 : vector<1xf32> to vector<1x1x1xf32>
    %80 = vector.extract %79[0, 0, 0] : f32 from vector<1x1x1xf32>
    %cst_41 = arith.constant 1.000000e+00 : f32
    %81 = vector.broadcast %cst_41 : f32 to vector<1x8x128xf32>
    %82 = vector.broadcast %80 : f32 to vector<1x8x128xf32>
    %83 = arith.mulf %82, %81 : vector<1x8x128xf32>
    %c0_42 = arith.constant 0 : index
    %c0_43 = arith.constant 0 : index
    %c0_44 = arith.constant 0 : index
    %84 = vector.load %arg13[%c0_42, %c0_43, %c0_44] : memref<1x8x128xf32, #tpu.memory_space<vmem>>, vector<1x8x128xf32>
    tpu.vector_store %arg13[%c0_42, %c0_43, %c0_44], %83 {strides = array<i32>} : memref<1x8x128xf32, #tpu.memory_space<vmem>>, vector<1x8x128xf32>,
    return
  }
  func.func @transform_0(%arg0: i32) -> (i32, i32) {
    %c0_i32 = arith.constant 0 : i32
    %c0_i32_0 = arith.constant 0 : i32
    return %arg0, %c0_i32 : i32, i32
  }
  func.func @transform_1(%arg0: i32) -> (i32, i32) {
    %c0_i32 = arith.constant 0 : i32
    %c0_i32_0 = arith.constant 0 : i32
    return %arg0, %c0_i32 : i32, i32
  }
  func.func @transform_2(%arg0: i32) -> (i32, i32) {
    %c0_i32 = arith.constant 0 : i32
    %c0_i32_0 = arith.constant 0 : i32
    %c0_i32_1 = arith.constant 0 : i32
    return %c0_i32, %c0_i32_0 : i32, i32
  }
  func.func @transform_3(%arg0: i32) -> (i32, i32) {
    %c0_i32 = arith.constant 0 : i32
    %c0_i32_0 = arith.constant 0 : i32
    %c0_i32_1 = arith.constant 0 : i32
    return %c0_i32, %c0_i32_0 : i32, i32
  }
  func.func @transform_4(%arg0: i32) -> (i32, i32) {
    %c0_i32 = arith.constant 0 : i32
    %c0_i32_0 = arith.constant 0 : i32
    %c0_i32_1 = arith.constant 0 : i32
    return %c0_i32, %c0_i32_0 : i32, i32
  }
  func.func @transform_5(%arg0: i32) -> (i32, i32) {
    %c0_i32 = arith.constant 0 : i32
    %c0_i32_0 = arith.constant 0 : i32
    %c0_i32_1 = arith.constant 0 : i32
    return %c0_i32, %c0_i32_0 : i32, i32
  }
  func.func @transform_6(%arg0: i32) -> (i32, i32) {
    %c0_i32 = arith.constant 0 : i32
    %c0_i32_0 = arith.constant 0 : i32
    %c0_i32_1 = arith.constant 0 : i32
    return %c0_i32, %c0_i32_0 : i32, i32
  }
  func.func @transform_7(%arg0: i32) -> (i32, i32) {
    %c0_i32 = arith.constant 0 : i32
    %c0_i32_0 = arith.constant 0 : i32
    %c0_i32_1 = arith.constant 0 : i32
    return %c0_i32, %c0_i32_0 : i32, i32
  }
  func.func @transform_8(%arg0: i32) -> (i32, i32) {
    %c0_i32 = arith.constant 0 : i32
    %c0_i32_0 = arith.constant 0 : i32
    %c0_i32_1 = arith.constant 0 : i32
    return %c0_i32, %c0_i32_0 : i32, i32
  }
  func.func @transform_9(%arg0: i32) -> (i32, i32) {
    %c0_i32 = arith.constant 0 : i32
    %c0_i32_0 = arith.constant 0 : i32
    %c0_i32_1 = arith.constant 0 : i32
    return %c0_i32, %c0_i32_0 : i32, i32
  }
  func.func @transform_10(%arg0: i32) -> (i32, i32) {
    %c0_i32 = arith.constant 0 : i32
    %c0_i32_0 = arith.constant 0 : i32
    %c0_i32_1 = arith.constant 0 : i32
    return %c0_i32, %c0_i32_0 : i32, i32
  }
  func.func @transform_11(%arg0: i32) -> (i32, i32) {
    %c0_i32 = arith.constant 0 : i32
    %c0_i32_0 = arith.constant 0 : i32
    %c0_i32_1 = arith.constant 0 : i32
    return %c0_i32, %c0_i32_0 : i32, i32
  }
  func.func @transform_12(%arg0: i32) -> (i32, i32, i32) {
    %c0_i32 = arith.constant 0 : i32
    %c0_i32_0 = arith.constant 0 : i32
    %c0_i32_1 = arith.constant 0 : i32
    return %arg0, %c0_i32, %c0_i32_0 : i32, i32, i32
  }
}

</mosaic_0001>

<llo_original>
// kernel: tpu_custom_call.1
$region0: #{tpu_custom_call.1}
  #allocation0 [shape = 'u32[]', space=smem, size = 0x4, offset = 0x4, fixed_abs, tag = 'smem constant byte address 0x4 - core index']
  #allocation1 [shape = 'u32[72,128]{1,0:T(1,128)}', space=vmem, size = 0x9000, scoped, tag = 'internal scratch']
  %s0 = inlined_call_operand.vmem [shape: f32[16,256], index: 0, kind: input, shape index: {}]
  %s1 = inlined_call_operand.vmem [shape: f32[16,8], index: 1, kind: input, shape index: {}]
  %s2 = inlined_call_operand.vmem [shape: bf16[256,32], index: 2, kind: input, shape index: {}]
  %s3 = inlined_call_operand.vmem [shape: f32[1,32], index: 3, kind: input, shape index: {}]
  %s4 = inlined_call_operand.vmem [shape: bf16[32,8], index: 4, kind: input, shape index: {}]
  %s5 = inlined_call_operand.vmem [shape: f32[1,8], index: 5, kind: input, shape index: {}]
  %s6 = inlined_call_operand.vmem [shape: bf16[32,8], index: 6, kind: input, shape index: {}]
  %s7 = inlined_call_operand.vmem [shape: f32[1,8], index: 7, kind: input, shape index: {}]
  %s8 = inlined_call_operand.vmem [shape: bf16[8,32], index: 8, kind: input, shape index: {}]
  %s9 = inlined_call_operand.vmem [shape: f32[1,32], index: 9, kind: input, shape index: {}]
  %s10 = inlined_call_operand.vmem [shape: bf16[32,256], index: 10, kind: input, shape index: {}]
  %s11 = inlined_call_operand.vmem [shape: f32[1,256], index: 11, kind: input, shape index: {}]
  %s12 = inlined_call_operand.hbm [shape: f32[2,8,128], index: 12, kind: output, shape index: {}]
  %s13 = sld [smem:[#allocation0]]
  $region81: #{tpu_custom_call.1} parent=0
    _
  %s15 = ssub.s32 1, %s13
  %s16 = scalar_select 0, %s15, %s13
  $region1: #{tpu_custom_call.1} parent=0
    #allocation2 [shape = 'u8[8192]{0}', space=vmem, size = 0x2000, scoped, tag = 'output window, operand 0']
    #allocation3 [shape = 's32[2]{0}', space=sflag, size = 0x8, scoped, tag = 'scoped memory for tpu_custom_call.1']
    %17 = vsyncpa [#allocation3], 0
    %s18 = scalar_lea.sflag [#allocation3], 1
    %19 = vsyncpa %s18, 0
    loop: start=0, step=1, limit=4
    $region2: #{tpu_custom_call.1} parent=1 // loop_pre_header
      _
    $region3: #{tpu_custom_call.1} parent=1 // loop_header
      %s21 = sphi 0, %s25
      %p22 = scmp.ge.s32.totalorder %s21, 4
      %s31 = sphi 0, %s33
      %s34 = sphi 0, %s31
      %s35 = sphi 0, %s34
      %s51 = sphi 0, %s35
      %s57 = sphi 0, %s59
      %s60 = sphi 0, %s57
      %s61 = sphi 0, %s60
      %s77 = sphi 0, %s61
      %s81 = sphi 0, %s81
      %s83 = sphi 0, %s81
      %s84 = sphi 0, %s83
      %s98 = sphi 0, %s84
      %s102 = sphi 0, %s102
      %s104 = sphi 0, %s102
      %s105 = sphi 0, %s104
      %s119 = sphi 0, %s105
      %s123 = sphi 0, %s123
      %s125 = sphi 0, %s123
      %s126 = sphi 0, %s125
      %s140 = sphi 0, %s126
      %s144 = sphi 0, %s144
      %s146 = sphi 0, %s144
      %s147 = sphi 0, %s146
      %s161 = sphi 0, %s147
      %s165 = sphi 0, %s165
      %s167 = sphi 0, %s165
      %s168 = sphi 0, %s167
      %s182 = sphi 0, %s168
      %s186 = sphi 0, %s186
      %s188 = sphi 0, %s186
      %s189 = sphi 0, %s188
      %s203 = sphi 0, %s189
      %s207 = sphi 0, %s207
      %s209 = sphi 0, %s207
      %s210 = sphi 0, %s209
      %s224 = sphi 0, %s210
      %s228 = sphi 0, %s228
      %s230 = sphi 0, %s228
      %s231 = sphi 0, %s230
      %s245 = sphi 0, %s231
      %s249 = sphi 0, %s249
      %s251 = sphi 0, %s249
      %s252 = sphi 0, %s251
      %s266 = sphi 0, %s252
      %s270 = sphi 0, %s270
      %s272 = sphi 0, %s270
      %s273 = sphi 0, %s272
      %s287 = sphi 0, %s273
      %s293 = sphi 0, %s295
      %s296 = sphi 0, %s293
      %s297 = sphi 0, %s296
      %s313 = sphi 0, %s297
    $region4: #{tpu_custom_call.1} parent=1 // loop_header_branch
      %24 = sbr.rel (%p22) target = $region8
    $region5: #{tpu_custom_call.1} parent=1 // loop_body
      %s26 = ssub.s32 %s21, 1
      %s27 = ssub.s32 %s21, 2
      %s28 = sadd.s32 %s21, 1
      %s29 = ssub.s32 %s21, %s28
      %p30 = scmp.eq.s32.totalorder %s29, 0
      %s32 = sadd.s32 %s31, 1
      %s33 = scalar_select %p30, %s31, %s32
      %p36 = pneg %p30
      %p37 = scmp.eq.s32.totalorder %s21, 1
      %p38 = por %p36, %p37
      %p39 = scmp.ne.s32.totalorder %s31, %s34
      %p40 = scmp.eq.s32.totalorder %s21, 0
      %p41 = por %p39, %p40
      %p42 = scmp.ne.s32.totalorder %s31, %s34
      %p43 = scmp.eq.s32.totalorder %s26, 1
      %p44 = por %p42, %p43
      %p45 = scmp.ne.s32.totalorder %s34, %s35
      %p46 = scmp.eq.s32.totalorder %s26, 0
      %p47 = por %p45, %p46
      %p48 = scmp.ne.s32.totalorder %s34, %s35
      %p49 = scmp.eq.s32.totalorder %s27, 1
      %p50 = por %p48, %p49
      %p52 = scmp.ne.s32.totalorder %s35, %s51
      %p53 = scmp.eq.s32.totalorder %s27, 0
      %p54 = por %p52, %p53
      %s55 = ssub.s32 %s21, %s28
      %p56 = scmp.eq.s32.totalorder %s55, 0
      %s58 = sadd.s32 %s57, 1
      %s59 = scalar_select %p56, %s57, %s58
      %p62 = pneg %p56
      %p63 = scmp.eq.s32.totalorder %s21, 1
      %p64 = por %p62, %p63
      %p65 = scmp.ne.s32.totalorder %s57, %s60
      %p66 = scmp.eq.s32.totalorder %s21, 0
      %p67 = por %p65, %p66
      %p68 = scmp.ne.s32.totalorder %s57, %s60
      %p69 = scmp.eq.s32.totalorder %s26, 1
      %p70 = por %p68, %p69
      %p71 = scmp.ne.s32.totalorder %s60, %s61
      %p72 = scmp.eq.s32.totalorder %s26, 0
      %p73 = por %p71, %p72
      %p74 = scmp.ne.s32.totalorder %s60, %s61
      %p75 = scmp.eq.s32.totalorder %s27, 1
      %p76 = por %p74, %p75
      %p78 = scmp.ne.s32.totalorder %s61, %s77
      %p79 = scmp.eq.s32.totalorder %s27, 0
      %p80 = por %p78, %p79
      %s82 = sadd.s32 %s81, 1
      %p85 = scmp.eq.s32.totalorder %s21, 1
      %p86 = scmp.ne.s32.totalorder %s81, %s83
      %p87 = scmp.eq.s32.totalorder %s21, 0
      %p88 = por %p86, %p87
      %p89 = scmp.ne.s32.totalorder %s81, %s83
      %p90 = scmp.eq.s32.totalorder %s26, 1
      %p91 = por %p89, %p90
      %p92 = scmp.ne.s32.totalorder %s83, %s84
      %p93 = scmp.eq.s32.totalorder %s26, 0
      %p94 = por %p92, %p93
      %p95 = scmp.ne.s32.totalorder %s83, %s84
      %p96 = scmp.eq.s32.totalorder %s27, 1
      %p97 = por %p95, %p96
      %p99 = scmp.ne.s32.totalorder %s84, %s98
      %p100 = scmp.eq.s32.totalorder %s27, 0
      %p101 = por %p99, %p100
      %s103 = sadd.s32 %s102, 1
      %p106 = scmp.eq.s32.totalorder %s21, 1
      %p107 = scmp.ne.s32.totalorder %s102, %s104
      %p108 = scmp.eq.s32.totalorder %s21, 0
      %p109 = por %p107, %p108
      %p110 = scmp.ne.s32.totalorder %s102, %s104
      %p111 = scmp.eq.s32.totalorder %s26, 1
      %p112 = por %p110, %p111
      %p113 = scmp.ne.s32.totalorder %s104, %s105
      %p114 = scmp.eq.s32.totalorder %s26, 0
      %p115 = por %p113, %p114
      %p116 = scmp.ne.s32.totalorder %s104, %s105
      %p117 = scmp.eq.s32.totalorder %s27, 1
      %p118 = por %p116, %p117
      %p120 = scmp.ne.s32.totalorder %s105, %s119
      %p121 = scmp.eq.s32.totalorder %s27, 0
      %p122 = por %p120, %p121
      %s124 = sadd.s32 %s123, 1
      %p127 = scmp.eq.s32.totalorder %s21, 1
      %p128 = scmp.ne.s32.totalorder %s123, %s125
      %p129 = scmp.eq.s32.totalorder %s21, 0
      %p130 = por %p128, %p129
      %p131 = scmp.ne.s32.totalorder %s123, %s125
      %p132 = scmp.eq.s32.totalorder %s26, 1
      %p133 = por %p131, %p132
      %p134 = scmp.ne.s32.totalorder %s125, %s126
      %p135 = scmp.eq.s32.totalorder %s26, 0
      %p136 = por %p134, %p135
      %p137 = scmp.ne.s32.totalorder %s125, %s126
      %p138 = scmp.eq.s32.totalorder %s27, 1
      %p139 = por %p137, %p138
      %p141 = scmp.ne.s32.totalorder %s126, %s140
      %p142 = scmp.eq.s32.totalorder %s27, 0
      %p143 = por %p141, %p142
      %s145 = sadd.s32 %s144, 1
      %p148 = scmp.eq.s32.totalorder %s21, 1
      %p149 = scmp.ne.s32.totalorder %s144, %s146
      %p150 = scmp.eq.s32.totalorder %s21, 0
      %p151 = por %p149, %p150
      %p152 = scmp.ne.s32.totalorder %s144, %s146
      %p153 = scmp.eq.s32.totalorder %s26, 1
      %p154 = por %p152, %p153
      %p155 = scmp.ne.s32.totalorder %s146, %s147
      %p156 = scmp.eq.s32.totalorder %s26, 0
      %p157 = por %p155, %p156
      %p158 = scmp.ne.s32.totalorder %s146, %s147
      %p159 = scmp.eq.s32.totalorder %s27, 1
      %p160 = por %p158, %p159
      %p162 = scmp.ne.s32.totalorder %s147, %s161
      %p163 = scmp.eq.s32.totalorder %s27, 0
      %p164 = por %p162, %p163
      %s166 = sadd.s32 %s165, 1
      %p169 = scmp.eq.s32.totalorder %s21, 1
      %p170 = scmp.ne.s32.totalorder %s165, %s167
      %p171 = scmp.eq.s32.totalorder %s21, 0
      %p172 = por %p170, %p171
      %p173 = scmp.ne.s32.totalorder %s165, %s167
      %p174 = scmp.eq.s32.totalorder %s26, 1
      %p175 = por %p173, %p174
      %p176 = scmp.ne.s32.totalorder %s167, %s168
      %p177 = scmp.eq.s32.totalorder %s26, 0
      %p178 = por %p176, %p177
      %p179 = scmp.ne.s32.totalorder %s167, %s168
      %p180 = scmp.eq.s32.totalorder %s27, 1
      %p181 = por %p179, %p180
      %p183 = scmp.ne.s32.totalorder %s168, %s182
      %p184 = scmp.eq.s32.totalorder %s27, 0
      %p185 = por %p183, %p184
      %s187 = sadd.s32 %s186, 1
      %p190 = scmp.eq.s32.totalorder %s21, 1
      %p191 = scmp.ne.s32.totalorder %s186, %s188
      %p192 = scmp.eq.s32.totalorder %s21, 0
      %p193 = por %p191, %p192
      %p194 = scmp.ne.s32.totalorder %s186, %s188
      %p195 = scmp.eq.s32.totalorder %s26, 1
      %p196 = por %p194, %p195
      %p197 = scmp.ne.s32.totalorder %s188, %s189
      %p198 = scmp.eq.s32.totalorder %s26, 0
      %p199 = por %p197, %p198
      %p200 = scmp.ne.s32.totalorder %s188, %s189
      %p201 = scmp.eq.s32.totalorder %s27, 1
      %p202 = por %p200, %p201
      %p204 = scmp.ne.s32.totalorder %s189, %s203
      %p205 = scmp.eq.s32.totalorder %s27, 0
      %p206 = por %p204, %p205
      %s208 = sadd.s32 %s207, 1
      %p211 = scmp.eq.s32.totalorder %s21, 1
      %p212 = scmp.ne.s32.totalorder %s207, %s209
      %p213 = scmp.eq.s32.totalorder %s21, 0
      %p214 = por %p212, %p213
      %p215 = scmp.ne.s32.totalorder %s207, %s209
      %p216 = scmp.eq.s32.totalorder %s26, 1
      %p217 = por %p215, %p216
      %p218 = scmp.ne.s32.totalorder %s209, %s210
      %p219 = scmp.eq.s32.totalorder %s26, 0
      %p220 = por %p218, %p219
      %p221 = scmp.ne.s32.totalorder %s209, %s210
      %p222 = scmp.eq.s32.totalorder %s27, 1
      %p223 = por %p221, %p222
      %p225 = scmp.ne.s32.totalorder %s210, %s224
      %p226 = scmp.eq.s32.totalorder %s27, 0
      %p227 = por %p225, %p226
      %s229 = sadd.s32 %s228, 1
      %p232 = scmp.eq.s32.totalorder %s21, 1
      %p233 = scmp.ne.s32.totalorder %s228, %s230
      %p234 = scmp.eq.s32.totalorder %s21, 0
      %p235 = por %p233, %p234
      %p236 = scmp.ne.s32.totalorder %s228, %s230
      %p237 = scmp.eq.s32.totalorder %s26, 1
      %p238 = por %p236, %p237
      %p239 = scmp.ne.s32.totalorder %s230, %s231
      %p240 = scmp.eq.s32.totalorder %s26, 0
      %p241 = por %p239, %p240
      %p242 = scmp.ne.s32.totalorder %s230, %s231
      %p243 = scmp.eq.s32.totalorder %s27, 1
      %p244 = por %p242, %p243
      %p246 = scmp.ne.s32.totalorder %s231, %s245
      %p247 = scmp.eq.s32.totalorder %s27, 0
      %p248 = por %p246, %p247
      %s250 = sadd.s32 %s249, 1
      %p253 = scmp.eq.s32.totalorder %s21, 1
      %p254 = scmp.ne.s32.totalorder %s249, %s251
      %p255 = scmp.eq.s32.totalorder %s21, 0
      %p256 = por %p254, %p255
      %p257 = scmp.ne.s32.totalorder %s249, %s251
      %p258 = scmp.eq.s32.totalorder %s26, 1
      %p259 = por %p257, %p258
      %p260 = scmp.ne.s32.totalorder %s251, %s252
      %p261 = scmp.eq.s32.totalorder %s26, 0
      %p262 = por %p260, %p261
      %p263 = scmp.ne.s32.totalorder %s251, %s252
      %p264 = scmp.eq.s32.totalorder %s27, 1
      %p265 = por %p263, %p264
      %p267 = scmp.ne.s32.totalorder %s252, %s266
      %p268 = scmp.eq.s32.totalorder %s27, 0
      %p269 = por %p267, %p268
      %s271 = sadd.s32 %s270, 1
      %p274 = scmp.eq.s32.totalorder %s21, 1
      %p275 = scmp.ne.s32.totalorder %s270, %s272
      %p276 = scmp.eq.s32.totalorder %s21, 0
      %p277 = por %p275, %p276
      %p278 = scmp.ne.s32.totalorder %s270, %s272
      %p279 = scmp.eq.s32.totalorder %s26, 1
      %p280 = por %p278, %p279
      %p281 = scmp.ne.s32.totalorder %s272, %s273
      %p282 = scmp.eq.s32.totalorder %s26, 0
      %p283 = por %p281, %p282
      %p284 = scmp.ne.s32.totalorder %s272, %s273
      %p285 = scmp.eq.s32.totalorder %s27, 1
      %p286 = por %p284, %p285
      %p288 = scmp.ne.s32.totalorder %s273, %s287
      %p289 = scmp.eq.s32.totalorder %s27, 0
      %p290 = por %p288, %p289
      %s291 = ssub.s32 %s21, %s28
      %p292 = scmp.eq.s32.totalorder %s291, 0
      %s294 = sadd.s32 %s293, 1
      %s295 = scalar_select %p292, %s293, %s294
      %p298 = pneg %p292
      %p299 = scmp.eq.s32.totalorder %s21, 1
      %p300 = por %p298, %p299
      %p301 = scmp.ne.s32.totalorder %s293, %s296
      %p302 = scmp.eq.s32.totalorder %s21, 0
      %p303 = por %p301, %p302
      %p304 = scmp.ne.s32.totalorder %s293, %s296
      %p305 = scmp.eq.s32.totalorder %s26, 1
      %p306 = por %p304, %p305
      %p307 = scmp.ne.s32.totalorder %s296, %s297
      %p308 = scmp.eq.s32.totalorder %s26, 0
      %p309 = por %p307, %p308
      %p310 = scmp.ne.s32.totalorder %s296, %s297
      %p311 = scmp.eq.s32.totalorder %s27, 1
      %p312 = por %p310, %p311
      %p314 = scmp.ne.s32.totalorder %s297, %s313
      %p315 = scmp.eq.s32.totalorder %s27, 0
      %p316 = por %p314, %p315
      %p317 = scmp.le.s32.totalorder 1, %s21
      %p318 = scmp.lt.s32.totalorder %s21, 3
      %p319 = pnand %p317, %p318
      %p320 = pneg %p319
      // Predicated region
      $region9: #{tpu_custom_call.1} parent=5 // pred_check
        _
      $region10: #{tpu_custom_call.1} parent=5 // pred_check_branch
        %322 = sbr.rel (%p319) target = $region12
      $region11: #{tpu_custom_call.1} parent=5 // pred_region
        %s323 = ssub.s32 %s21, 1
        // Predicated region
        $region13: #{tpu_custom_call.1} parent=11 // pred_check
          %p324 = pneg %p94
        $region14: #{tpu_custom_call.1} parent=11 // pred_check_branch
          %326 = sbr.rel (%p324) target = $region16
        $region15: #{tpu_custom_call.1} parent=11 // pred_region
          _
        $region16: #{tpu_custom_call.1} parent=11 // pred_fallthru
          _
        // Predicated region
        $region17: #{tpu_custom_call.1} parent=11 // pred_check
          %p327 = pneg %p115
        $region18: #{tpu_custom_call.1} parent=11 // pred_check_branch
          %329 = sbr.rel (%p327) target = $region20
        $region19: #{tpu_custom_call.1} parent=11 // pred_region
          _
        $region20: #{tpu_custom_call.1} parent=11 // pred_fallthru
          _
        // Predicated region
        $region21: #{tpu_custom_call.1} parent=11 // pred_check
          %p330 = pneg %p136
        $region22: #{tpu_custom_call.1} parent=11 // pred_check_branch
          %332 = sbr.rel (%p330) target = $region24
        $region23: #{tpu_custom_call.1} parent=11 // pred_region
          _
        $region24: #{tpu_custom_call.1} parent=11 // pred_fallthru
          _
        // Predicated region
        $region25: #{tpu_custom_call.1} parent=11 // pred_check
          %p333 = pneg %p157
        $region26: #{tpu_custom_call.1} parent=11 // pred_check_branch
          %335 = sbr.rel (%p333) target = $region28
        $region27: #{tpu_custom_call.1} parent=11 // pred_region
          _
        $region28: #{tpu_custom_call.1} parent=11 // pred_fallthru
          _
        // Predicated region
        $region29: #{tpu_custom_call.1} parent=11 // pred_check
          %p336 = pneg %p178
        $region30: #{tpu_custom_call.1} parent=11 // pred_check_branch
          %338 = sbr.rel (%p336) target = $region32
        $region31: #{tpu_custom_call.1} parent=11 // pred_region
          _
        $region32: #{tpu_custom_call.1} parent=11 // pred_fallthru
          _
        // Predicated region
        $region33: #{tpu_custom_call.1} parent=11 // pred_check
          %p339 = pneg %p199
        $region34: #{tpu_custom_call.1} parent=11 // pred_check_branch
          %341 = sbr.rel (%p339) target = $region36
        $region35: #{tpu_custom_call.1} parent=11 // pred_region
          _
        $region36: #{tpu_custom_call.1} parent=11 // pred_fallthru
          _
        // Predicated region
        $region37: #{tpu_custom_call.1} parent=11 // pred_check
          %p342 = pneg %p220
        $region38: #{tpu_custom_call.1} parent=11 // pred_check_branch
          %344 = sbr.rel (%p342) target = $region40
        $region39: #{tpu_custom_call.1} parent=11 // pred_region
          _
        $region40: #{tpu_custom_call.1} parent=11 // pred_fallthru
          _
        // Predicated region
        $region41: #{tpu_custom_call.1} parent=11 // pred_check
          %p345 = pneg %p241
        $region42: #{tpu_custom_call.1} parent=11 // pred_check_branch
          %347 = sbr.rel (%p345) target = $region44
        $region43: #{tpu_custom_call.1} parent=11 // pred_region
          _
        $region44: #{tpu_custom_call.1} parent=11 // pred_fallthru
          _
        // Predicated region
        $region45: #{tpu_custom_call.1} parent=11 // pred_check
          %p348 = pneg %p262
        $region46: #{tpu_custom_call.1} parent=11 // pred_check_branch
          %350 = sbr.rel (%p348) target = $region48
        $region47: #{tpu_custom_call.1} parent=11 // pred_region
          _
        $region48: #{tpu_custom_call.1} parent=11 // pred_fallthru
          _
        // Predicated region
        $region49: #{tpu_custom_call.1} parent=11 // pred_check
          %p351 = pneg %p283
        $region50: #{tpu_custom_call.1} parent=11 // pred_check_branch
          %353 = sbr.rel (%p351) target = $region52
        $region51: #{tpu_custom_call.1} parent=11 // pred_region
          _
        $region52: #{tpu_custom_call.1} parent=11 // pred_fallthru
          _
      $region12: #{tpu_custom_call.1} parent=5 // pred_fallthru
        _
      %p354 = scmp.lt.s32.totalorder %s21, 2
      // Predicated region
      $region53: #{tpu_custom_call.1} parent=5 // pred_check
        %p355 = pneg %p354
      $region54: #{tpu_custom_call.1} parent=5 // pred_check_branch
        %357 = sbr.rel (%p355) target = $region56
      $region55: #{tpu_custom_call.1} parent=5 // pred_region
        // Predicated region
        $region57: #{tpu_custom_call.1} parent=55 // pred_check
          %p358 = pneg %p41
        $region58: #{tpu_custom_call.1} parent=55 // pred_check_branch
          %360 = sbr.rel (%p358) target = $region60
        $region59: #{tpu_custom_call.1} parent=55 // pred_region
          %p361 = scmp.lt.s32.totalorder %s21, 1
          %s362 = scalar_select %p361, %s21, 1
          %s363 = smul.addr %s362, 2
          %s364 = smul.addr %s363, 8
          %s365 = scalar_lea.vmem %s0, %s364
        $region60: #{tpu_custom_call.1} parent=55 // pred_fallthru
          _
        // Predicated region
        $region61: #{tpu_custom_call.1} parent=55 // pred_check
          %p366 = pneg %p67
        $region62: #{tpu_custom_call.1} parent=55 // pred_check_branch
          %368 = sbr.rel (%p366) target = $region64
        $region63: #{tpu_custom_call.1} parent=55 // pred_region
          %p369 = scmp.lt.s32.totalorder %s21, 1
          %s370 = scalar_select %p369, %s21, 1
          %s371 = smul.addr %s370, 8
          %s372 = scalar_lea.vmem %s1, %s371
        $region64: #{tpu_custom_call.1} parent=55 // pred_fallthru
          _
      $region56: #{tpu_custom_call.1} parent=5 // pred_fallthru
        _
      %p373 = scmp.le.s32.totalorder 1, %s21
      %p374 = scmp.lt.s32.totalorder %s21, 3
      %p375 = pnand %p373, %p374
      %p376 = pneg %p375
      // Predicated region
      $region65: #{tpu_custom_call.1} parent=5 // pred_check
        _
      $region66: #{tpu_custom_call.1} parent=5 // pred_check_branch
        %378 = sbr.rel (%p375) target = $region68
      $region67: #{tpu_custom_call.1} parent=5 // pred_region
        %s379 = ssub.s32 %s21, 1
        %p380 = scmp.lt.s32.totalorder %s26, 1
        %s381 = scalar_select %p380, %s26, 1
        %s382 = smul.addr %s381, 2
        %s383 = smul.addr %s382, 8
        %s384 = scalar_lea.vmem %s0, %s383
        %p385 = pneg %p47
        %p386 = pneg %p44
        %p387 = scmp.lt.s32.totalorder %s26, 1
        %s388 = scalar_select %p387, %s26, 1
        %s389 = smul.addr %s388, 8
        %s390 = scalar_lea.vmem %s1, %s389
        %p391 = pneg %p73
        %p392 = pneg %p70
        %p393 = pneg %p94
        %p394 = pneg %p91
        %p395 = pneg %p115
        %p396 = pneg %p112
        %p397 = pneg %p136
        %p398 = pneg %p133
        %p399 = pneg %p157
        %p400 = pneg %p154
        %p401 = pneg %p178
        %p402 = pneg %p175
        %p403 = pneg %p199
        %p404 = pneg %p196
        %p405 = pneg %p220
        %p406 = pneg %p217
        %p407 = pneg %p241
        %p408 = pneg %p238
        %p409 = pneg %p262
        %p410 = pneg %p259
        %p411 = pneg %p283
        %p412 = pneg %p280
        %p413 = pneg %p309
        %p414 = pneg %p306
        %s415 = sand.u32 %s296, 1
        %s416 = scalar_lea.sflag [#allocation3], %s415
        %s417 = sand.u32 %s296, 1
        %s418 = smul.addr %s417, 8
        %s419 = scalar_lea.vmem [#allocation2], %s418
        %p420 = scmp.lt.s32.totalorder %s26, 1
        %s421 = scalar_select %p420, %s26, 1
        %s422 = smul.addr %s421, 2
        %s423 = smul.addr %s422, 8
        %s424 = scalar_lea.vmem %s0, %s423
        %p425 = scmp.lt.s32.totalorder %s26, 1
        %s426 = scalar_select %p425, %s26, 1
        %s427 = smul.addr %s426, 8
        %s428 = scalar_lea.vmem %s1, %s427
        %v430 = vld [vmem:[%s424] sm:$0xff]
        %v431 = vld [vmem:[%s424 + $0x8] sm:$0xff]
        %v432 = vld [vmem:[%s428] sm:$0xff]
        %v433 = vpack.c.bf16 %v430, %v430
        %v434 = vpack.c.bf16 %v431, %v431
        %v435 = vld [vmem:[%s2] sm:$0xf]
        %v436 = vld [vmem:[%s2 + $0x4] sm:$0xf]
        %v437 = vld [vmem:[%s2 + $0x8] sm:$0xf]
        %v438 = vld [vmem:[%s2 + $0xc] sm:$0xf]
        %v439 = vld [vmem:[%s2 + $0x10] sm:$0xf]
        %v440 = vld [vmem:[%s2 + $0x14] sm:$0xf]
        %v441 = vld [vmem:[%s2 + $0x18] sm:$0xf]
        %v442 = vld [vmem:[%s2 + $0x1c] sm:$0xf]
        %v443 = vld [vmem:[%s2 + $0x20] sm:$0xf]
        %v444 = vld [vmem:[%s2 + $0x24] sm:$0xf]
        %v445 = vld [vmem:[%s2 + $0x28] sm:$0xf]
        %v446 = vld [vmem:[%s2 + $0x2c] sm:$0xf]
        %v447 = vld [vmem:[%s2 + $0x30] sm:$0xf]
        %v448 = vld [vmem:[%s2 + $0x34] sm:$0xf]
        %v449 = vld [vmem:[%s2 + $0x38] sm:$0xf]
        %v450 = vld [vmem:[%s2 + $0x3c] sm:$0xf]
        %v451 = vld [vmem:[%s2 + $0x40] sm:$0xf]
        %v452 = vld [vmem:[%s2 + $0x44] sm:$0xf]
        %v453 = vld [vmem:[%s2 + $0x48] sm:$0xf]
        %v454 = vld [vmem:[%s2 + $0x4c] sm:$0xf]
        %v455 = vld [vmem:[%s2 + $0x50] sm:$0xf]
        %v456 = vld [vmem:[%s2 + $0x54] sm:$0xf]
        %v457 = vld [vmem:[%s2 + $0x58] sm:$0xf]
        %v458 = vld [vmem:[%s2 + $0x5c] sm:$0xf]
        %v459 = vld [vmem:[%s2 + $0x60] sm:$0xf]
        %v460 = vld [vmem:[%s2 + $0x64] sm:$0xf]
        %v461 = vld [vmem:[%s2 + $0x68] sm:$0xf]
        %v462 = vld [vmem:[%s2 + $0x6c] sm:$0xf]
        %v463 = vld [vmem:[%s2 + $0x70] sm:$0xf]
        %v464 = vld [vmem:[%s2 + $0x74] sm:$0xf]
        %v465 = vld [vmem:[%s2 + $0x78] sm:$0xf]
        %v466 = vld [vmem:[%s2 + $0x7c] sm:$0xf]
        %v467 = vld [vmem:[%s3] sm:$0x1]
        %v469 = vperm.slane %v467, 0
        %v503 = vunpack.c.l.b16 %v435
        %v504 = vunpack.c.l.b16 %v436
        %v505 = vunpack.c.l.b16 %v437
        %v506 = vunpack.c.l.b16 %v438
        %v507 = vunpack.c.l.b16 %v439
        %v508 = vunpack.c.l.b16 %v440
        %v509 = vunpack.c.l.b16 %v441
        %v510 = vunpack.c.l.b16 %v442
        %v511 = vunpack.c.l.b16 %v443
        %v512 = vunpack.c.l.b16 %v444
        %v513 = vunpack.c.l.b16 %v445
        %v514 = vunpack.c.l.b16 %v446
        %v515 = vunpack.c.l.b16 %v447
        %v516 = vunpack.c.l.b16 %v448
        %v517 = vunpack.c.l.b16 %v449
        %v518 = vunpack.c.l.b16 %v450
        %v519 = vunpack.c.l.b16 %v451
        %v520 = vunpack.c.l.b16 %v452
        %v521 = vunpack.c.l.b16 %v453
        %v522 = vunpack.c.l.b16 %v454
        %v523 = vunpack.c.l.b16 %v455
        %v524 = vunpack.c.l.b16 %v456
        %v525 = vunpack.c.l.b16 %v457
        %v526 = vunpack.c.l.b16 %v458
        %v527 = vunpack.c.l.b16 %v459
        %v528 = vunpack.c.l.b16 %v460
        %v529 = vunpack.c.l.b16 %v461
        %v530 = vunpack.c.l.b16 %v462
        %v531 = vunpack.c.l.b16 %v463
        %v532 = vunpack.c.l.b16 %v464
        %v533 = vunpack.c.l.b16 %v465
        %v534 = vunpack.c.l.b16 %v466
        %v535 = vpack.c.b16 %v504, %v503
        %v536 = vpack.c.b16 %v506, %v505
        %v537 = vpack.c.b16 %v508, %v507
        %v538 = vpack.c.b16 %v510, %v509
        %v539 = vpack.c.b16 %v512, %v511
        %v540 = vpack.c.b16 %v514, %v513
        %v541 = vpack.c.b16 %v516, %v515
        %v542 = vpack.c.b16 %v518, %v517
        %v543 = vpack.c.b16 %v520, %v519
        %v544 = vpack.c.b16 %v522, %v521
        %v545 = vpack.c.b16 %v524, %v523
        %v546 = vpack.c.b16 %v526, %v525
        %v547 = vpack.c.b16 %v528, %v527
        %v548 = vpack.c.b16 %v530, %v529
        %v549 = vpack.c.b16 %v532, %v531
        %v550 = vpack.c.b16 %v534, %v533
        %567 = vmatpush.bf16.msra.mxu0 %v542
        %568 = vmatpush.bf16.msra.mxu0 %v541
        %569 = vmatpush.bf16.msra.mxu0 %v540
        %570 = vmatpush.bf16.msra.mxu0 %v539
        %571 = vmatpush.bf16.msra.mxu0 %v538
        %572 = vmatpush.bf16.msra.mxu0 %v537
        %573 = vmatpush.bf16.msra.mxu0 %v536
        %574 = vmatpush.bf16.msra.mxu0 %v535
        %575 = vmatmul.bf16.gmra.mxu0 %v433
        %v576 = vpop.f32.mrf.mxu0
        %v577 = vadd.f32 %v469, %v576
        %v578 = vpop.f32.mrf.mxu0
        %579 = vdwg.mxu0
        %580 = vmatpush.bf16.msra.mxu0 %v550
        %581 = vmatpush.bf16.msra.mxu0 %v549
        %582 = vmatpush.bf16.msra.mxu0 %v548
        %583 = vmatpush.bf16.msra.mxu0 %v547
        %584 = vmatpush.bf16.msra.mxu0 %v546
        %585 = vmatpush.bf16.msra.mxu0 %v545
        %586 = vmatpush.bf16.msra.mxu0 %v544
        %587 = vmatpush.bf16.msra.mxu0 %v543
        %588 = vmatmul.bf16.gmra.mxu0 %v434
        %v589 = vpop.f32.mrf.mxu0
        %v590 = vadd.f32 %v577, %v589
        %v591 = vpop.f32.mrf.mxu0
        %592 = vdwg.mxu0
        %v593 = vmax.f32 %v590, 0.0
        %v594 = vpack.c.bf16 %v593, %v593
        %v595 = vld [vmem:[%s4] sm:$0xf]
        %v596 = vld [vmem:[%s4 + $0x4] sm:$0xf]
        %v597 = vld [vmem:[%s4 + $0x8] sm:$0xf]
        %v598 = vld [vmem:[%s4 + $0xc] sm:$0xf]
        %v599 = vld [vmem:[%s5] sm:$0x1]
        %v601 = vperm.slane %v599, 0
        %v607 = vunpack.c.l.b16 %v595
        %v608 = vunpack.c.l.b16 %v596
        %v609 = vunpack.c.l.b16 %v597
        %v610 = vunpack.c.l.b16 %v598
        %v611 = vpack.c.b16 %v608, %v607
        %v612 = vpack.c.b16 %v610, %v609
        %vm615 = vcmask 261120
        %v617 = vsel %vm615, %v594, 0
        %619 = vmatpush.bf16.msra.mxu0 0
        %620 = vmatpush.bf16.msra.mxu0 0
        %621 = vmatpush.bf16.msra.mxu0 0
        %622 = vmatpush.bf16.msra.mxu0 0
        %623 = vmatpush.bf16.msra.mxu0 0
        %624 = vmatpush.bf16.msra.mxu0 0
        %625 = vmatpush.bf16.msra.mxu0 %v612
        %626 = vmatpush.bf16.msra.mxu0 %v611
        %627 = vmatmul.bf16.gmra.mxu0 %v617
        %v628 = vpop.f32.mrf.mxu0
        %v629 = vadd.f32 %v601, %v628
        %v630 = vpop.f32.mrf.mxu0
        %631 = vdwg.mxu0
        %v632 = vld [vmem:[%s6] sm:$0xf]
        %v633 = vld [vmem:[%s6 + $0x4] sm:$0xf]
        %v634 = vld [vmem:[%s6 + $0x8] sm:$0xf]
        %v635 = vld [vmem:[%s6 + $0xc] sm:$0xf]
        %v636 = vld [vmem:[%s7] sm:$0x1]
        %v638 = vperm.slane %v636, 0
        %v644 = vunpack.c.l.b16 %v632
        %v645 = vunpack.c.l.b16 %v633
        %v646 = vunpack.c.l.b16 %v634
        %v647 = vunpack.c.l.b16 %v635
        %v648 = vpack.c.b16 %v645, %v644
        %v649 = vpack.c.b16 %v647, %v646
        %652 = vmatpush.bf16.msra.mxu0 0
        %653 = vmatpush.bf16.msra.mxu0 0
        %654 = vmatpush.bf16.msra.mxu0 0
        %655 = vmatpush.bf16.msra.mxu0 0
        %656 = vmatpush.bf16.msra.mxu0 0
        %657 = vmatpush.bf16.msra.mxu0 0
        %658 = vmatpush.bf16.msra.mxu0 %v649
        %659 = vmatpush.bf16.msra.mxu0 %v648
        %660 = vmatmul.bf16.gmra.mxu0 %v617
        %v661 = vpop.f32.mrf.mxu0
        %v662 = vadd.f32 %v638, %v661
        %v663 = vpop.f32.mrf.mxu0
        %664 = vdwg.mxu0
        %v665 = vmul.f32 %v662, 1.442695
        %v666 = vpow.pop %v665
        %v667 = vmul.f32 %v666, %v432
        %v668 = vadd.f32 %v629, %v667
        %v669 = vsub.f32 0.0, %v662
        %v670 = vmul.f32 %v432, %v432
        %v671 = vmul.f32 %v670, 0.5
        %v672 = vsub.f32 %v669, %v671
        %v673 = vsub.f32 %v672, 0.9189385
        %vm674 = vcmask 64512
        %v675 = vsel %vm674, %v673, 0.0
        %676 = vadd.xlane.f32.xlu0 %v675
        %v677 = vpop.xlane.xlu0 %676
        %v678 = vmul.f32 %v668, %v668
        %v679 = vmul.f32 %v678, -0.5
        %v680 = vsub.f32 %v679, 0.9189385
        %v681 = vsel %vm674, %v680, 0.0
        %682 = vadd.xlane.f32.xlu0 %v681
        %v683 = vpop.xlane.xlu0 %682
        %v684 = vpack.c.bf16 %v668, %v668
        %v685 = vld [vmem:[%s8] sm:$0xf]
        %v686 = vld [vmem:[%s9] sm:$0x1]
        %v688 = vperm.slane %v686, 0
        %v691 = vsel %vm674, %v684, 0
        %vm693 = vcmask 1043456
        %v695 = vsel %vm693, %v685, 0
        %697 = vmatpush.bf16.msra.mxu0 0
        %698 = vmatpush.bf16.msra.mxu0 0
        %699 = vmatpush.bf16.msra.mxu0 0
        %700 = vmatpush.bf16.msra.mxu0 0
        %701 = vmatpush.bf16.msra.mxu0 0
        %702 = vmatpush.bf16.msra.mxu0 0
        %703 = vmatpush.bf16.msra.mxu0 0
        %704 = vmatpush.bf16.msra.mxu0 %v695
        %705 = vmatmul.bf16.gmra.mxu0 %v691
        %v706 = vpop.f32.mrf.mxu0
        %v707 = vadd.f32 %v688, %v706
        %v708 = vpop.f32.mrf.mxu0
        %709 = vdwg.mxu0
        %v710 = vmax.f32 %v707, 0.0
        %v711 = vpack.c.bf16 %v710, %v710
        %v712 = vld [vmem:[%s10] sm:$0xff]
        %v713 = vld [vmem:[%s10 + $0x8] sm:$0xff]
        %v714 = vld [vmem:[%s10 + $0x10] sm:$0xff]
        %v715 = vld [vmem:[%s10 + $0x18] sm:$0xff]
        %v716 = vld [vmem:[%s11] sm:$0x3]
        %v718 = vperm.slane %v716, 0
        %v719 = vperm.slane %v716, 1
        %v726 = vunpack.c.l.b16 %v712
        %v727 = vunpack.c.h.b16 %v712
        %v728 = vunpack.c.l.b16 %v713
        %v729 = vunpack.c.h.b16 %v713
        %v730 = vunpack.c.l.b16 %v714
        %v731 = vunpack.c.h.b16 %v714
        %v732 = vunpack.c.l.b16 %v715
        %v733 = vunpack.c.h.b16 %v715
        %v734 = vpack.c.b16 %v728, %v726
        %v735 = vpack.c.b16 %v729, %v727
        %v736 = vpack.c.b16 %v732, %v730
        %v737 = vpack.c.b16 %v733, %v731
        %v743 = vsel %vm615, %v711, 0
        %745 = vmatpush.bf16.msra.mxu0 0
        %746 = vmatpush.bf16.msra.mxu0 0
        %747 = vmatpush.bf16.msra.mxu0 0
        %748 = vmatpush.bf16.msra.mxu0 0
        %749 = vmatpush.bf16.msra.mxu0 0
        %750 = vmatpush.bf16.msra.mxu0 0
        %751 = vmatpush.bf16.msra.mxu0 %v736
        %752 = vmatpush.bf16.msra.mxu0 %v734
        %753 = vmatmul.bf16.gmra.mxu0 %v743
        %v754 = vpop.f32.mrf.mxu0
        %v755 = vadd.f32 %v718, %v754
        %v756 = vpop.f32.mrf.mxu0
        %757 = vdwg.mxu0
        %758 = vmatpush.bf16.msra.mxu0 0
        %759 = vmatpush.bf16.msra.mxu0 0
        %760 = vmatpush.bf16.msra.mxu0 0
        %761 = vmatpush.bf16.msra.mxu0 0
        %762 = vmatpush.bf16.msra.mxu0 0
        %763 = vmatpush.bf16.msra.mxu0 0
        %764 = vmatpush.bf16.msra.mxu0 %v737
        %765 = vmatpush.bf16.msra.mxu0 %v735
        %766 = vmatmul.bf16.gmra.mxu0 %v743
        %v767 = vpop.f32.mrf.mxu0
        %v768 = vadd.f32 %v719, %v767
        %v769 = vpop.f32.mrf.mxu0
        %770 = vdwg.mxu0
        %v771 = vmax.f32 %v755, 0.0
        %v772 = vmax.f32 %v768, 0.0
        %v773 = vand.u32 2147483647, %v755
        %v774 = vand.u32 2147483647, %v768
        %v775 = vsub.f32 0.0, %v773
        %v776 = vsub.f32 0.0, %v774
        %v777 = vmul.f32 %v775, 1.442695
        %v778 = vpow.pop %v777
        %v779 = vmul.f32 %v776, 1.442695
        %v780 = vpow.pop %v779
        %v781 = vadd.f32 %v778, 1.0
        %v782 = vlog2.pop %v781
        %v783 = vmul.f32 %v782, 0.6931472
        %v784 = vmul.f32 -0.5, %v778
        %v785 = vadd.f32 %v784, 1.0
        %v786 = vmul.f32 %v785, %v778
        %v787 = vand.u32 2147483647, %v778
        %vm788 = vcmp.lt.f32.partialorder %v787, 0.0004427343
        %v789 = vsel %vm788, %v786, %v783
        %v790 = vadd.f32 %v780, 1.0
        %v791 = vlog2.pop %v790
        %v792 = vmul.f32 %v791, 0.6931472
        %v793 = vmul.f32 -0.5, %v780
        %v794 = vadd.f32 %v793, 1.0
        %v795 = vmul.f32 %v794, %v780
        %v796 = vand.u32 2147483647, %v780
        %vm797 = vcmp.lt.f32.partialorder %v796, 0.0004427343
        %v798 = vsel %vm797, %v795, %v792
        %v799 = vadd.f32 %v771, %v789
        %v800 = vadd.f32 %v772, %v798
        %v801 = vmul.f32 %v430, %v755
        %v802 = vmul.f32 %v431, %v768
        %v803 = vsub.f32 %v801, %v799
        %v804 = vsub.f32 %v802, %v800
        %v805 = vadd.f32 %v803, %v804
        %806 = vadd.xlane.f32.xlu0 %v805
        %v807 = vpop.xlane.xlu0 %806
        %v808 = vadd.f32 %v807, %v683
        %v809 = vsub.f32 %v808, %v677
        %v810 = vlaneseq
        %v811 = vshrl.u32 %v810, 7
        %s812 = smul.u32 %s26, 8
        %v813 = vstv %s812
        %v814 = vadd.s32 %v811, %v813
        %vm815 = vcmp.lt.s32.totalorder %v814, 16
        %v816 = vsel %vm815, %v809, 0.0
        %vm817 = vcmask 7168
        %v818 = vsel %vm817, %v816, 0.0
        %819 = vadd.xlane.f32.xlu0 %v818
        %v820 = vpop.xlane.xlu0 %819
        %v821 = vrot.slane %v820, 4
        %v822 = vadd.f32 %v820, %v821
        %v823 = vrot.slane %v822, 2
        %v824 = vadd.f32 %v822, %v823
        %v825 = vrot.slane %v824, 1
        %v826 = vadd.f32 %v824, %v825
        %s827 = vtos %v826
        %v828 = vstv %s827
        %829 = vst [vmem:[%s419] sm:$0xff] %v828
        %s830 = sand.u32 %s296, 1
        %s831 = scalar_lea.sflag [#allocation3], %s830
        %s832 = sand.u32 %s296, 1
        %s833 = smul.addr %s832, 8
        %s834 = scalar_lea.vmem [#allocation2], %s833
        // Predicated region
        $region69: #{tpu_custom_call.1} parent=67 // pred_check
          %p835 = pneg %p306
        $region70: #{tpu_custom_call.1} parent=67 // pred_check_branch
          %837 = sbr.rel (%p835) target = $region72
        $region71: #{tpu_custom_call.1} parent=67 // pred_region
          %839 = vsyncadd %s831, 0
          %s840 = smul.addr %s26, 8
          %s841 = scalar_lea.hbm %s12, %s840
          %s843 = sshll.u32 %s834, 4
          %s844 = int_to_ptr.vmem [resolvable:$true] %s843
          %s845 = sshll.u32 %s841, 4
          %s846 = int_to_ptr.hbm [resolvable:$true] %s845
          %848 = dma.vmem_to_hbm [thread:$0]  %s844, 128, %s846, %s831
        $region72: #{tpu_custom_call.1} parent=67 // pred_fallthru
          _
      $region68: #{tpu_custom_call.1} parent=5 // pred_fallthru
        _
      %p849 = scmp.le.s32.totalorder 2, %s21
      // Predicated region
      $region73: #{tpu_custom_call.1} parent=5 // pred_check
        %p850 = pneg %p849
      $region74: #{tpu_custom_call.1} parent=5 // pred_check_branch
        %852 = sbr.rel (%p850) target = $region76
      $region75: #{tpu_custom_call.1} parent=5 // pred_region
        %s853 = ssub.s32 %s21, 2
        // Predicated region
        $region77: #{tpu_custom_call.1} parent=75 // pred_check
          %p854 = pneg %p312
        $region78: #{tpu_custom_call.1} parent=75 // pred_check_branch
          %856 = sbr.rel (%p854) target = $region80
        $region79: #{tpu_custom_call.1} parent=75 // pred_region
          %s857 = sand.u32 %s297, 1
          %s858 = scalar_lea.sflag [#allocation3], %s857
          %s859 = sand.u32 %s297, 1
          %s860 = smul.addr %s859, 8
          %s861 = scalar_lea.vmem [#allocation2], %s860
          %863 = dma.done %s858, 128
        $region80: #{tpu_custom_call.1} parent=75 // pred_fallthru
          _
      $region76: #{tpu_custom_call.1} parent=5 // pred_fallthru
        _
    $region6: #{tpu_custom_call.1} parent=1 // loop_footer
      %s25 = sadd.s32 1, %s21
    $region7: #{tpu_custom_call.1} parent=1 // loop_footer_branch
      %20 = sbr.rel target = $region3
    $region8: #{tpu_custom_call.1} parent=1 // loop_exit
      _
    %864 = vsyncpa [#allocation3], 1
    %s865 = scalar_lea.sflag [#allocation3], 1
    %866 = vsyncpa %s865, 1

</llo_original>
